<compile_context>
chip_gen: v7x
topology: tpu7x:2x2x1
jax: 0.10.0
libtpu: 0.0.40
codegen_flags: <defaults>
</compile_context>

<pallas_src>
import jax
import jax.numpy as jnp
from jax import lax
from jax.experimental import pallas as pl
from jax.experimental.pallas import tpu as pltpu


def _cdiv(a, b):
    return -(-a // b)


def _round_up(a, b):
    return _cdiv(a, b) * b


def _default_num_shards():
    # Shard the lane reduction only on multi-TensorCore chips (v7x).  On
    # single-core chips the extra shard is pure overhead, so fall back to 1
    # whenever detection is unavailable.
    try:
        info = pltpu.get_tpu_info()
    except Exception:
        return 1
    for attr in ("num_cores", "core_count", "num_tensorcores",
                 "tensorcores_per_chip", "cores_per_chip"):
        v = getattr(info, attr, None)
        if isinstance(v, int) and v > 0:
            return min(int(v), 2)
    return 1


def _make_dice_kernel(tile_r, tile_l, lbps, num_lb, total_l, needs_mask):
    n_chunks = tile_l // 128

    def compute(x_ref, y_ref, col0, masked):
        # Masked path only runs for the single global tail lane block.
        if masked:
            lane0 = jax.lax.broadcasted_iota(jnp.int32, (tile_r, 128), 1) + col0

        def body(j, carry):
            acc_i, acc_s = carry
            start = j * 128
            if not isinstance(start, int):
                start = pl.multiple_of(start, 128)
            xc = x_ref[:, pl.ds(start, 128)].astype(jnp.float32)
            yc = y_ref[:, pl.ds(start, 128)].astype(jnp.float32)
            if masked:
                valid = (lane0 + j * 128) < total_l
                # select (not arithmetic mask): OOB garbage incl. NaN -> 0
                xc = jnp.where(valid, xc, 0.0)
                yc = jnp.where(valid, yc, 0.0)
            return acc_i + xc * yc, acc_s + (xc + yc)

        init = (jnp.zeros((tile_r, 128), jnp.float32),
                jnp.zeros((tile_r, 128), jnp.float32))
        if n_chunks <= 8:
            acc = init
            for j in range(n_chunks):
                acc = body(j, acc)
            return acc
        # Bounded live ranges + scheduler visibility for large lane tiles.
        return lax.fori_loop(0, n_chunks, body, init, unroll=8)

    def kernel(x_ref, y_ref, inter_ref, intra_ref):
        s = pl.program_id(0)   # lane-reduction shard (leading, core-parallel)
        k = pl.program_id(2)   # lane block within shard (reduction axis)

        def write(acc_i, acc_s):
            # First lane block assigns (saves zero-fill + RMW pass), later
            # blocks accumulate into the resident output block.
            @pl.when(k == 0)
            def _():
                inter_ref[...] = acc_i
                intra_ref[...] = acc_s

            @pl.when(k > 0)
            def _():
                inter_ref[...] += acc_i
                intra_ref[...] += acc_s

        if not needs_mask:
            acc_i, acc_s = compute(x_ref, y_ref, 0, False)
            write(acc_i, acc_s)
        elif num_lb == 1:
            acc_i, acc_s = compute(x_ref, y_ref, 0, True)
            write(acc_i, acc_s)
        else:
            g = s * lbps + k   # global lane block index

            @pl.when(g != num_lb - 1)
            def _():
                acc_i, acc_s = compute(x_ref, y_ref, 0, False)
                write(acc_i, acc_s)

            @pl.when(g == num_lb - 1)
            def _():
                acc_i, acc_s = compute(x_ref, y_ref, (num_lb - 1) * tile_l, True)
                write(acc_i, acc_s)

    return kernel


def dice_loss(inp, target, smooth=1.0, tile_l=8192, num_shards=None):
    """inp, target: [B, C, H, W] (or [B, C, H, W, D]). Returns scalar f32."""
    assert inp.shape == target.shape
    assert inp.ndim >= 3, "expect [batch, channel, spatial...]"
    B, C = int(inp.shape[0]), int(inp.shape[1])
    L = 1
    for d in inp.shape[2:]:
        L *= int(d)
    R = B * C

    # Free row-major views: no transpose, no pad, no dtype cast in HBM.
    x = inp.reshape(R, L)
    y = target.reshape(R, L)

    # Row (sublane) tile <= 64 so both f32 accumulators stay in registers.
    R_CAP = 64
    tile_r = R if R <= R_CAP else R_CAP
    num_rb = _cdiv(R, tile_r)
    R_pad = num_rb * tile_r

    # Lane tile: multiple of 128, sized against a conservative ~8 MiB budget
    # (2 inputs x 2 pipeline buffers), safe under the v5e 16 MiB scoped
    # default and v7x's smaller physical VMEM.
    itemsize = max(inp.dtype.itemsize, target.dtype.itemsize)
    vmem_budget = 8 * 1024 * 1024
    tl_cap = max(128, (vmem_budget // (4 * tile_r * itemsize)) // 128 * 128)
    tl = min(_round_up(int(tile_l), 128), tl_cap, _round_up(L, 128))
    num_lb = _cdiv(L, tl)

    # Shards: only useful on multi-core chips; only counts that divide num_lb
    # (no clamped redundant blocks, no whole-stream masking).
    shards = _default_num_shards() if num_shards is None else int(num_shards)
    shards = max(1, min(shards, num_lb))
    while num_lb % shards != 0:
        shards -= 1
    lbps = num_lb // shards
    needs_mask = (L % tl) != 0   # only the global last lane block is ragged

    in_map = lambda s, i, k: (i, s * lbps + k)
    out_map = lambda s, i, k: (s, i, 0)

    kernel = _make_dice_kernel(tile_r, tl, lbps, num_lb, L, needs_mask)

    out_bytes = 2 * shards * R_pad * 128 * 4
    cost = pl.CostEstimate(
        flops=4 * R * L,
        transcendentals=0,
        bytes_accessed=R * L * (inp.dtype.itemsize + target.dtype.itemsize)
        + out_bytes,
    )

    inter_p, intra_p = pl.pallas_call(
        kernel,
        out_shape=(
            jax.ShapeDtypeStruct((shards, R_pad, 128), jnp.float32),
            jax.ShapeDtypeStruct((shards, R_pad, 128), jnp.float32),
        ),
        grid_spec=pltpu.PrefetchScalarGridSpec(
            num_scalar_prefetch=0,
            grid=(shards, num_rb, lbps),
            in_specs=[
                pl.BlockSpec((tile_r, tl), in_map),
                pl.BlockSpec((tile_r, tl), in_map),
            ],
            out_specs=[
                pl.BlockSpec((None, tile_r, 128), out_map),
                pl.BlockSpec((None, tile_r, 128), out_map),
            ],
        ),
        compiler_params=pltpu.CompilerParams(
            dimension_semantics=("parallel", "parallel", "arbitrary"),
        ),
        cost_estimate=cost,
    )(x, y)

    # Tiny finalize in plain JAX: fold shards + lanes, drop row padding,
    # fold batch rows into per-channel sums, apply the dice formula.
    inter_r = inter_p.sum(axis=(0, 2))[:R]           # (B*C,)
    intra_r = intra_p.sum(axis=(0, 2))[:R]
    inter_c = inter_r.reshape(B, C).sum(axis=0)      # (C,)
    intra_c = intra_r.reshape(B, C).sum(axis=0)
    dice = 1.0 - (2.0 * inter_c + float(smooth)) / (intra_c + float(smooth))
    return dice.mean()


def dice_loss_ref(inp, target, smooth=1.0):
    C = inp.shape[1]
    perm = (1, 0) + tuple(range(2, inp.ndim))
    x = jnp.transpose(inp, perm).reshape(C, -1).astype(jnp.float32)
    y = jnp.transpose(target, perm).reshape(C, -1).astype(jnp.float32)
    inter = (x * y).sum(1)
    intra = x.sum(1) + y.sum(1)
    dice = 1.0 - (2.0 * inter + smooth) / (intra + smooth)
    return dice.mean()


if __name__ == "__main__":
    key = jax.random.PRNGKey(0)
    k1, k2, k3, k4, k5, k6 = jax.random.split(key, 6)

    # Primary small test (typical NCHW usage of the module).
    B, C, H, W = 2, 4, 16, 16
    x = jax.random.uniform(k1, (B, C, H, W), dtype=jnp.float32)
    t = (jax.random.uniform(k2, (B, C, H, W)) > 0.5).astype(jnp.float32)
    out = jax.block_until_ready(dice_loss(x, t, smooth=1.0))
    ref = dice_loss_ref(x, t, smooth=1.0)
    assert jnp.allclose(out, ref, rtol=1e-5, atol=1e-5), (out, ref)

    # Sharded lane reduction + masked tail block (shards divide num_lb).
    B2, C2, H2, W2 = 2, 4, 30, 30
    x2 = jax.random.uniform(k3, (B2, C2, H2, W2), dtype=jnp.float32)
    t2 = (jax.random.uniform(k4, (B2, C2, H2, W2)) > 0.5).astype(jnp.float32)
    out2 = jax.block_until_ready(
        dice_loss(x2, t2, smooth=1.0, tile_l=256, num_shards=2))
    ref2 = dice_loss_ref(x2, t2, smooth=1.0)
    assert jnp.allclose(out2, ref2, rtol=1e-5, atol=1e-5), (out2, ref2)

    # Large lane tile -> fori_loop chunk path with a ragged masked tail.
    B3, C3, H3, W3 = 2, 4, 50, 50
    x3 = jax.random.uniform(k5, (B3, C3, H3, W3), dtype=jnp.float32)
    t3 = (jax.random.uniform(k6, (B3, C3, H3, W3)) > 0.5).astype(jnp.float32)
    out3 = jax.block_until_ready(dice_loss(x3, t3, smooth=1.0))
    ref3 = dice_loss_ref(x3, t3, smooth=1.0)
    assert jnp.allclose(out3, ref3, rtol=1e-5, atol=1e-5), (out3, ref3)

    print("KERNEL_OK")
</pallas_src>

<mosaic_0001>
module attributes {stable_mosaic.version = 11 : i64} {
  func.func @kernel(%arg0: i32, %arg1: i32, %arg2: i32, %arg3: memref<8x256xf32, #tpu.memory_space<vmem>>, %arg4: memref<8x256xf32, #tpu.memory_space<vmem>>, %arg5: memref<1x8x128xf32, #tpu.memory_space<vmem>>, %arg6: memref<1x8x128xf32, #tpu.memory_space<vmem>>) attributes {dimension_semantics = [#tpu.dimension_semantics<parallel>, #tpu.dimension_semantics<parallel>, #tpu.dimension_semantics<arbitrary>], iteration_bounds = array<i64: 1, 1, 1>, scalar_prefetch = 0 : i64, scratch_operands = 0 : i64, tpu.core_type = #tpu.core_type<tc>, window_params = [{transform_indices = @transform_0, window_bounds = array<i64: 8, 256>}, {transform_indices = @transform_1, window_bounds = array<i64: 8, 256>}, {transform_indices = @transform_2, window_bounds = array<i64: 1, 8, 128>}, {transform_indices = @transform_3, window_bounds = array<i64: 1, 8, 128>}]} {
    %cst = arith.constant 0.000000e+00 : f32
    %0 = vector.broadcast %cst : f32 to vector<8x128xf32>
    %cst_0 = arith.constant 0.000000e+00 : f32
    %1 = vector.broadcast %cst_0 : f32 to vector<8x128xf32>
    %c0 = arith.constant 0 : index
    %c0_1 = arith.constant 0 : index
    %2 = vector.load %arg3[%c0, %c0_1] : memref<8x256xf32, #tpu.memory_space<vmem>>, vector<8x128xf32>
    %c0_2 = arith.constant 0 : index
    %c0_3 = arith.constant 0 : index
    %3 = vector.load %arg4[%c0_2, %c0_3] : memref<8x256xf32, #tpu.memory_space<vmem>>, vector<8x128xf32>
    %4 = arith.mulf %2, %3 : vector<8x128xf32>
    %5 = arith.addf %0, %4 : vector<8x128xf32>
    %6 = arith.addf %2, %3 : vector<8x128xf32>
    %7 = arith.addf %1, %6 : vector<8x128xf32>
    %c0_4 = arith.constant 0 : index
    %c128 = arith.constant 128 : index
    %8 = vector.load %arg3[%c0_4, %c128] : memref<8x256xf32, #tpu.memory_space<vmem>>, vector<8x128xf32>
    %c0_5 = arith.constant 0 : index
    %c128_6 = arith.constant 128 : index
    %9 = vector.load %arg4[%c0_5, %c128_6] : memref<8x256xf32, #tpu.memory_space<vmem>>, vector<8x128xf32>
    %10 = arith.mulf %8, %9 : vector<8x128xf32>
    %11 = arith.addf %5, %10 : vector<8x128xf32>
    %12 = arith.addf %8, %9 : vector<8x128xf32>
    %13 = arith.addf %7, %12 : vector<8x128xf32>
    %c0_i32 = arith.constant 0 : i32
    %14 = arith.cmpi eq, %arg2, %c0_i32 : i32
    %15 = arith.extui %14 : i1 to i32
    %c0_i32_7 = arith.constant 0 : i32
    %16 = arith.cmpi ne, %15, %c0_i32_7 : i32
    scf.if %16 {
      %c0_10 = arith.constant 0 : index
      %c0_11 = arith.constant 0 : index
      %c0_12 = arith.constant 0 : index
      %20 = vector.load %arg5[%c0_10, %c0_11, %c0_12] : memref<1x8x128xf32, #tpu.memory_space<vmem>>, vector<1x8x128xf32>
      %21 = vector.shape_cast %20 : vector<1x8x128xf32> to vector<8x128xf32>
      %22 = vector.shape_cast %11 : vector<8x128xf32> to vector<1x8x128xf32>
      tpu.vector_store %arg5[%c0_10, %c0_11, %c0_12], %22 {strides = array<i32>} : memref<1x8x128xf32, #tpu.memory_space<vmem>>, vector<1x8x128xf32>,
      %c0_13 = arith.constant 0 : index
      %c0_14 = arith.constant 0 : index
      %c0_15 = arith.constant 0 : index
      %23 = vector.load %arg6[%c0_13, %c0_14, %c0_15] : memref<1x8x128xf32, #tpu.memory_space<vmem>>, vector<1x8x128xf32>
      %24 = vector.shape_cast %23 : vector<1x8x128xf32> to vector<8x128xf32>
      %25 = vector.shape_cast %13 : vector<8x128xf32> to vector<1x8x128xf32>
      tpu.vector_store %arg6[%c0_13, %c0_14, %c0_15], %25 {strides = array<i32>} : memref<1x8x128xf32, #tpu.memory_space<vmem>>, vector<1x8x128xf32>,
    } else {
    }
    %c0_i32_8 = arith.constant 0 : i32
    %17 = arith.cmpi sgt, %arg2, %c0_i32_8 : i32
    %18 = arith.extui %17 : i1 to i32
    %c0_i32_9 = arith.constant 0 : i32
    %19 = arith.cmpi ne, %18, %c0_i32_9 : i32
    scf.if %19 {
      %c0_10 = arith.constant 0 : index
      %c0_11 = arith.constant 0 : index
      %c0_12 = arith.constant 0 : index
      %20 = vector.load %arg5[%c0_10, %c0_11, %c0_12] : memref<1x8x128xf32, #tpu.memory_space<vmem>>, vector<1x8x128xf32>
      %21 = vector.shape_cast %20 : vector<1x8x128xf32> to vector<8x128xf32>
      %22 = arith.addf %21, %11 : vector<8x128xf32>
      %c0_13 = arith.constant 0 : index
      %c0_14 = arith.constant 0 : index
      %c0_15 = arith.constant 0 : index
      %23 = vector.load %arg5[%c0_13, %c0_14, %c0_15] : memref<1x8x128xf32, #tpu.memory_space<vmem>>, vector<1x8x128xf32>
      %24 = vector.shape_cast %23 : vector<1x8x128xf32> to vector<8x128xf32>
      %25 = vector.shape_cast %22 : vector<8x128xf32> to vector<1x8x128xf32>
      tpu.vector_store %arg5[%c0_13, %c0_14, %c0_15], %25 {strides = array<i32>} : memref<1x8x128xf32, #tpu.memory_space<vmem>>, vector<1x8x128xf32>,
      %c0_16 = arith.constant 0 : index
      %c0_17 = arith.constant 0 : index
      %c0_18 = arith.constant 0 : index
      %26 = vector.load %arg6[%c0_16, %c0_17, %c0_18] : memref<1x8x128xf32, #tpu.memory_space<vmem>>, vector<1x8x128xf32>
      %27 = vector.shape_cast %26 : vector<1x8x128xf32> to vector<8x128xf32>
      %28 = arith.addf %27, %13 : vector<8x128xf32>
      %c0_19 = arith.constant 0 : index
      %c0_20 = arith.constant 0 : index
      %c0_21 = arith.constant 0 : index
      %29 = vector.load %arg6[%c0_19, %c0_20, %c0_21] : memref<1x8x128xf32, #tpu.memory_space<vmem>>, vector<1x8x128xf32>
      %30 = vector.shape_cast %29 : vector<1x8x128xf32> to vector<8x128xf32>
      %31 = vector.shape_cast %28 : vector<8x128xf32> to vector<1x8x128xf32>
      tpu.vector_store %arg6[%c0_19, %c0_20, %c0_21], %31 {strides = array<i32>} : memref<1x8x128xf32, #tpu.memory_space<vmem>>, vector<1x8x128xf32>,
    } else {
    }
    return
  }
  func.func @transform_0(%arg0: i32, %arg1: i32, %arg2: i32) -> (i32, i32) {
    %c1_i32 = arith.constant 1 : i32
    %0 = arith.muli %arg0, %c1_i32 : i32
    %1 = arith.addi %0, %arg2 : i32
    %c0_i32 = arith.constant 0 : i32
    return %arg1, %1 : i32, i32
  }
  func.func @transform_1(%arg0: i32, %arg1: i32, %arg2: i32) -> (i32, i32) {
    %c1_i32 = arith.constant 1 : i32
    %0 = arith.muli %arg0, %c1_i32 : i32
    %1 = arith.addi %0, %arg2 : i32
    %c0_i32 = arith.constant 0 : i32
    return %arg1, %1 : i32, i32
  }
  func.func @transform_2(%arg0: i32, %arg1: i32, %arg2: i32) -> (i32, i32, i32) {
    %c0_i32 = arith.constant 0 : i32
    %c0_i32_0 = arith.constant 0 : i32
    return %arg0, %arg1, %c0_i32 : i32, i32, i32
  }
  func.func @transform_3(%arg0: i32, %arg1: i32, %arg2: i32) -> (i32, i32, i32) {
    %c0_i32 = arith.constant 0 : i32
    %c0_i32_0 = arith.constant 0 : i32
    return %arg0, %arg1, %c0_i32 : i32, i32, i32
  }
}

</mosaic_0001>

<llo_original>
// kernel: tpu_custom_call.1
$region0: #{tpu_custom_call.1}
  #allocation0 [shape = 'u32[]', space=smem, size = 0x4, offset = 0x4, fixed_abs, tag = 'smem constant byte address 0x4 - core index']
  #allocation1 [shape = 'u32[144,128]{1,0:T(1,128)}', space=vmem, size = 0x12000, scoped, tag = 'internal scratch']
  %s0 = inlined_call_operand.hbm [shape: f32[8,256], index: 0, kind: input, shape index: {}]
  %s1 = inlined_call_operand.hbm [shape: f32[8,256], index: 1, kind: input, shape index: {}]
  %s2 = inlined_call_operand.hbm [shape: f32[1,8,128], index: 2, kind: output, shape index: {0}]
  %s3 = inlined_call_operand.hbm [shape: f32[1,8,128], index: 3, kind: output, shape index: {1}]
  %4 = xla_tuple %s2, %s3
  %s5 = sld [smem:[#allocation0]]
  $region42: #{tpu_custom_call.1} parent=0
    _
  %s7 = ssub.s32 1, %s5
  %s8 = scalar_select 0, %s7, %s5
  $region1: #{tpu_custom_call.1} parent=0
    #allocation2 [shape = 'u8[8192]{0}', space=vmem, size = 0x2000, scoped, tag = 'input window, operand 0, single buffered']
    #allocation3 [shape = 's32[1]{0}', space=sflag, size = 0x4, scoped, tag = 'scoped memory for tpu_custom_call.1']
    #allocation4 [shape = 's32[1]{0}', space=sflag, size = 0x4, scoped, tag = 'scoped memory for tpu_custom_call.1']
    #allocation5 [shape = 'u8[8192]{0}', space=vmem, size = 0x2000, scoped, tag = 'input window, operand 1, single buffered']
    #allocation6 [shape = 's32[1]{0}', space=sflag, size = 0x4, scoped, tag = 'scoped memory for tpu_custom_call.1']
    #allocation7 [shape = 'u8[4096]{0}', space=vmem, size = 0x1000, scoped, tag = 'output window, operand 0, single buffered']
    #allocation8 [shape = 'u8[4096]{0}', space=vmem, size = 0x1000, scoped, tag = 'output window, operand 1, single buffered']
    #allocation9 [shape = 's32[1]{0}', space=sflag, size = 0x4, scoped, tag = 'scoped memory for tpu_custom_call.1']
    %9 = vsyncpa [#allocation3], 0
    %10 = vsyncpa [#allocation6], 0
    %11 = vsyncpa [#allocation4], 0
    %12 = vsyncpa [#allocation9], 0
    // Predicated region
    $region2: #{tpu_custom_call.1} parent=1 // pred_check
      _
    $region3: #{tpu_custom_call.1} parent=1 // pred_check_branch
      %14 = sbr.rel (0) target = $region5
    $region4: #{tpu_custom_call.1} parent=1 // pred_region
      %s15 = sadd.s32 0, 0
      %s16 = smul.u32 2, %s15
      %s18 = ssub.s32 256, 256
      %19 = vsyncadd [#allocation3], %s18
      %s20 = smul.addr %s16, 128
      %s21 = scalar_lea.hbm %s0, %s20
      %s23 = sshll.u32 [#allocation2], 4
      %s24 = int_to_ptr.vmem [resolvable:$true] %s23
      %26 = dma.hbm_to_vmem [thread:$0]  %s21, 256, %s24, [#allocation3]
    $region5: #{tpu_custom_call.1} parent=1 // pred_fallthru
      _
    // Predicated region
    $region6: #{tpu_custom_call.1} parent=1 // pred_check
      _
    $region7: #{tpu_custom_call.1} parent=1 // pred_check_branch
      %28 = sbr.rel (0) target = $region9
    $region8: #{tpu_custom_call.1} parent=1 // pred_region
      %s29 = sadd.s32 0, 0
      %s30 = smul.u32 2, %s29
      %s32 = ssub.s32 256, 256
      %33 = vsyncadd [#allocation6], %s32
      %s34 = smul.addr %s30, 128
      %s35 = scalar_lea.hbm %s1, %s34
      %s37 = sshll.u32 [#allocation5], 4
      %s38 = int_to_ptr.vmem [resolvable:$true] %s37
      %40 = dma.hbm_to_vmem [thread:$0]  %s35, 256, %s38, [#allocation6]
    $region9: #{tpu_custom_call.1} parent=1 // pred_fallthru
      _
    // Predicated region
    $region10: #{tpu_custom_call.1} parent=1 // pred_check
      _
    $region11: #{tpu_custom_call.1} parent=1 // pred_check_branch
      %42 = sbr.rel (0) target = $region13
    $region12: #{tpu_custom_call.1} parent=1 // pred_region
      %43 = dma.done [#allocation3], 256
    $region13: #{tpu_custom_call.1} parent=1 // pred_fallthru
      _
    // Predicated region
    $region14: #{tpu_custom_call.1} parent=1 // pred_check
      _
    $region15: #{tpu_custom_call.1} parent=1 // pred_check_branch
      %45 = sbr.rel (0) target = $region17
    $region16: #{tpu_custom_call.1} parent=1 // pred_region
      %46 = dma.done [#allocation6], 256
    $region17: #{tpu_custom_call.1} parent=1 // pred_fallthru
      _
    %s47 = sadd.s32 0, 0
    %s48 = smul.u32 2, %s47
    %s49 = sadd.s32 0, 0
    %s50 = smul.u32 2, %s49
    %v51 = vld [vmem:[#allocation2] sm:$0xff]
    %v52 = vld [vmem:[#allocation5] sm:$0xff]
    %v53 = vmul.f32 %v51, %v52
    %v54 = vadd.f32 %v53, 0.0
    %v55 = vadd.f32 %v51, %v52
    %v56 = vadd.f32 %v55, 0.0
    %v57 = vld [vmem:[#allocation2 + $0x8] sm:$0xff]
    %v58 = vld [vmem:[#allocation5 + $0x8] sm:$0xff]
    %v59 = vmul.f32 %v57, %v58
    %v60 = vadd.f32 %v54, %v59
    %v61 = vadd.f32 %v57, %v58
    %v62 = vadd.f32 %v56, %v61
    %p63 = scmp.eq.s32.totalorder 0, 0
    // Predicated region
    $region18: #{tpu_custom_call.1} parent=1 // pred_check
      %p64 = pneg %p63
    $region19: #{tpu_custom_call.1} parent=1 // pred_check_branch
      %66 = sbr.rel (%p64) target = $region21
    $region20: #{tpu_custom_call.1} parent=1 // pred_region
      %67 = vst [vmem:[#allocation7] sm:$0xff] %v60
      %68 = vst [vmem:[#allocation8] sm:$0xff] %v62
    $region21: #{tpu_custom_call.1} parent=1 // pred_fallthru
      _
    %p69 = scmp.gt.s32.totalorder 0, 0
    // Predicated region
    $region22: #{tpu_custom_call.1} parent=1 // pred_check
      %p70 = pneg %p69
    $region23: #{tpu_custom_call.1} parent=1 // pred_check_branch
      %72 = sbr.rel (%p70) target = $region25
    $region24: #{tpu_custom_call.1} parent=1 // pred_region
      %v73 = vld [vmem:[#allocation7] sm:$0xff]
      %v74 = vadd.f32 %v73, %v60
      %75 = vst [vmem:[#allocation7] sm:$0xff] %v74
      %v76 = vld [vmem:[#allocation8] sm:$0xff]
      %v77 = vadd.f32 %v76, %v62
      %78 = vst [vmem:[#allocation8] sm:$0xff] %v77
    $region25: #{tpu_custom_call.1} parent=1 // pred_fallthru
      _
    // Predicated region
    $region26: #{tpu_custom_call.1} parent=1 // pred_check
      _
    $region27: #{tpu_custom_call.1} parent=1 // pred_check_branch
      %80 = sbr.rel (0) target = $region29
    $region28: #{tpu_custom_call.1} parent=1 // pred_region
      %s82 = ssub.s32 128, 128
      %83 = vsyncadd [#allocation4], %s82
      %s85 = sshll.u32 [#allocation7], 4
      %s86 = int_to_ptr.vmem [resolvable:$true] %s85
      %88 = dma.vmem_to_hbm [thread:$0]  %s86, 128, %s2, [#allocation4]
    $region29: #{tpu_custom_call.1} parent=1 // pred_fallthru
      _
    // Predicated region
    $region30: #{tpu_custom_call.1} parent=1 // pred_check
      _
    $region31: #{tpu_custom_call.1} parent=1 // pred_check_branch
      %90 = sbr.rel (0) target = $region33
    $region32: #{tpu_custom_call.1} parent=1 // pred_region
      %s92 = ssub.s32 128, 128
      %93 = vsyncadd [#allocation9], %s92
      %s95 = sshll.u32 [#allocation8], 4
      %s96 = int_to_ptr.vmem [resolvable:$true] %s95
      %98 = dma.vmem_to_hbm [thread:$0]  %s96, 128, %s3, [#allocation9]
    $region33: #{tpu_custom_call.1} parent=1 // pred_fallthru
      _
    // Predicated region
    $region34: #{tpu_custom_call.1} parent=1 // pred_check
      _
    $region35: #{tpu_custom_call.1} parent=1 // pred_check_branch
      %100 = sbr.rel (0) target = $region37
    $region36: #{tpu_custom_call.1} parent=1 // pred_region
      %101 = dma.done [#allocation4], 128
    $region37: #{tpu_custom_call.1} parent=1 // pred_fallthru
      _
    // Predicated region
    $region38: #{tpu_custom_call.1} parent=1 // pred_check
      _
    $region39: #{tpu_custom_call.1} parent=1 // pred_check_branch
      %103 = sbr.rel (0) target = $region41
    $region40: #{tpu_custom_call.1} parent=1 // pred_region
      %104 = dma.done [#allocation9], 128
    $region41: #{tpu_custom_call.1} parent=1 // pred_fallthru
      _
    %105 = vsyncpa [#allocation3], 1
    %106 = vsyncpa [#allocation6], 1
    %107 = vsyncpa [#allocation4], 1
    %108 = vsyncpa [#allocation9], 1

</llo_original>
